<compile_context>
chip_gen: v6e
topology: v6e:2x2x1
jax: 0.10.0
libtpu: 0.0.40
codegen_flags: <defaults>
</compile_context>

<pallas_src>
import functools
import math

import jax
import jax.numpy as jnp
from jax import lax
from jax.experimental import pallas as pl
from jax.experimental.pallas import tpu as pltpu

_MIB = 1024 * 1024


# ----------------------------- tiling helpers ---------------------------------

def _pick_tile(dim, target):
    """Largest divisor of `dim` <= target that is a 128-multiple (lane dense);
    falls back to an 8-multiple >= 128, else the full dim.

    128-aligned tiles keep MXU rows/columns full and stores unmasked.  The
    full-dim fallback is always a legal BlockSpec (caveat: for huge
    non-divisible dims it yields one large block, so keep targets modest).
    """
    if dim <= target:
        return dim
    t = (target // 128) * 128
    while t >= 128:
        if dim % t == 0:
            return t
        t -= 128
    t = (target // 8) * 8
    while t >= 128:
        if dim % t == 0:
            return t
        t -= 8
    return dim


def _mosaic_params(dimension_semantics, block_bytes):
    """CompilerParams with an explicit VMEM budget sized to the actual tiles.

    Never below the 32 MiB scoped default (small kernels behave as before),
    1.5x headroom for compiler-internal scratch, capped below v5e/v6e physical
    VMEM.  Tile choices below keep the computed need well under v7x's 64 MiB.
    """
    limit = int(min(max(32 * _MIB, 1.5 * block_bytes + 2 * _MIB), 120 * _MIB))
    return pltpu.CompilerParams(dimension_semantics=dimension_semantics,
                                vmem_limit_bytes=limit)


# index_map factories (avoid default-arg lambdas; each call closes over `col`)
def _qmap2(col):
    return lambda b, i: (b, i, col)


def _kvmap2(col):
    return lambda b, i: (b, 0, col)


def _qmap3(col):
    return lambda b, i, j: (b, i, col)


def _kvmap3(col):
    return lambda b, i, j: (b, j, col)


# ----------------------------- tiled GEMM --------------------------------------

def _matmul_kernel(x_ref, w_ref, o_ref, acc_ref):
    """One (tm, tn) output tile; K reduced over grid axis 2 into a f32 VMEM acc."""
    @pl.when(pl.program_id(2) == 0)
    def _():
        acc_ref[...] = jnp.zeros_like(acc_ref)

    x = x_ref[...]
    w = w_ref[...]
    if x.dtype != w.dtype:  # f32 activation x bf16 weight: run the MXU in bf16
        x = x.astype(w.dtype)
    acc_ref[...] += jnp.dot(x, w, preferred_element_type=jnp.float32)

    @pl.when(pl.program_id(2) == pl.num_programs(2) - 1)
    def _():
        o_ref[...] = acc_ref[...].astype(o_ref.dtype)


def _tiled_matmul(x, w, *, out_dtype=None, tm=512, tn=512, tk=256):
    """x:(M,K) @ w:(K,N) -> (M,N), tiled/pipelined on the MXU (f32 accumulate)."""
    M, K = x.shape
    K2, N = w.shape
    assert K == K2
    out_dtype = out_dtype or x.dtype
    tm = _pick_tile(M, tm)
    tn = _pick_tile(N, tn)
    tk = _pick_tile(K, tk)
    block_bytes = (2 * (tm * tk * x.dtype.itemsize
                        + tk * tn * w.dtype.itemsize
                        + tm * tn * jnp.dtype(out_dtype).itemsize)
                   + tm * tn * 4)
    return pl.pallas_call(
        _matmul_kernel,
        out_shape=jax.ShapeDtypeStruct((M, N), out_dtype),
        grid=(M // tm, N // tn, K // tk),
        in_specs=[
            pl.BlockSpec((tm, tk), lambda i, j, k: (i, k)),
            pl.BlockSpec((tk, tn), lambda i, j, k: (k, j)),
        ],
        out_specs=pl.BlockSpec((tm, tn), lambda i, j, k: (i, j)),
        scratch_shapes=[pltpu.VMEM((tm, tn), jnp.float32)],
        compiler_params=_mosaic_params(("parallel", "parallel", "arbitrary"),
                                       block_bytes),
    )(x, w)


# --------------------- attention (materialized weights) -----------------------

def _attention_weights_kernel(q_ref, k_ref, v_ref, o_ref, w_ref, *,
                              num_heads, head_dim):
    # Blocks: q/o (1, tq, C); k/v (1, Tk, C); w (1, H, tq, Tk).
    # NOTE: per-head contraction depth = head_dim; prefer head_dim as a
    # 128-multiple for full MXU utilization.
    q = q_ref[0]  # (tq, C) -- q already scaled by 1/sqrt(d_k) (folded into Wq)
    k = k_ref[0]  # (Tk, C)
    v = v_ref[0]  # (Tk, C)
    for h in range(num_heads):  # static unroll over heads, direct per-head stores
        lo = h * head_dim
        qh = q[:, lo:lo + head_dim]
        kh = k[:, lo:lo + head_dim]
        vh = v[:, lo:lo + head_dim]
        # q @ k^T without materializing k.T (contract last dims of both).
        s = lax.dot_general(qh, kh, (((1,), (1,)), ((), ())),
                            preferred_element_type=jnp.float32)      # (tq, Tk)
        s = s - jnp.max(s, axis=-1, keepdims=True)
        p = jnp.exp(s)
        p = p / jnp.sum(p, axis=-1, keepdims=True)  # exact: weights are returned
        w_ref[0, h] = p.astype(w_ref.dtype)
        o_ref[0, :, lo:lo + head_dim] = jnp.dot(
            p.astype(vh.dtype), vh,
            preferred_element_type=jnp.float32).astype(o_ref.dtype)


def _attention_with_weights(q, k, v, num_heads, head_dim, *, cols=(0, 0, 0),
                            wei_dtype=jnp.float32, tq_target=256):
    """q/k/v: (B, T, C) (or the fused (B, T, 3C) array with column blocks in
    `cols`).  Returns (out (B, Tq, C), attn_wei (B, H, Tq, Tk)).

    Materializes the per-head score matrix (required when attn_wei is
    requested); O(T^2) HBM writeback -- use the flash path for long T.
    """
    B, Tq = q.shape[0], q.shape[1]
    Tk = k.shape[1]
    C = num_heads * head_dim
    qc, kc, vc = cols
    wei_isz = jnp.dtype(wei_dtype).itemsize
    act_isz = q.dtype.itemsize
    # Budget-aware query tile: keep the double-buffered (1, H, tq, Tk) weights
    # block around <= 12 MiB even at large T (v7x 64 MiB VMEM headroom).
    row_bytes = max(1, 2 * num_heads * Tk * wei_isz)
    tq_cap = max(128, (12 * _MIB // row_bytes) // 128 * 128)
    tq = _pick_tile(Tq, min(tq_target, tq_cap))
    block_bytes = (2 * (2 * tq * C + 2 * Tk * C) * act_isz
                   + 2 * num_heads * tq * Tk * wei_isz)
    kern = functools.partial(_attention_weights_kernel, num_heads=num_heads,
                             head_dim=head_dim)
    return pl.pallas_call(
        kern,
        out_shape=(
            jax.ShapeDtypeStruct((B, Tq, C), q.dtype),
            jax.ShapeDtypeStruct((B, num_heads, Tq, Tk), wei_dtype),
        ),
        grid=(B, Tq // tq),
        in_specs=[
            pl.BlockSpec((1, tq, C), _qmap2(qc)),
            pl.BlockSpec((1, Tk, C), _kvmap2(kc)),
            pl.BlockSpec((1, Tk, C), _kvmap2(vc)),
        ],
        out_specs=(
            pl.BlockSpec((1, tq, C), _qmap2(0)),
            pl.BlockSpec((1, num_heads, tq, Tk), lambda b, i: (b, 0, i, 0)),
        ),
        compiler_params=_mosaic_params(("parallel", "parallel"), block_bytes),
    )(q, k, v)


# --------------------- attention (flash / online softmax) ---------------------

def _flash_attention_kernel(q_ref, k_ref, v_ref, o_ref, m_ref, l_ref, acc_ref, *,
                            num_heads, head_dim):
    # grid = (B, Tq//tq, Tk//tkv); kv axis last ("arbitrary"), scores stay in VMEM.
    kv = pl.program_id(2)

    @pl.when(kv == 0)
    def _():
        m_ref[...] = jnp.full_like(m_ref, -jnp.inf)
        l_ref[...] = jnp.zeros_like(l_ref)
        acc_ref[...] = jnp.zeros_like(acc_ref)

    q = q_ref[0]  # (tq, C) -- already scaled by 1/sqrt(d_k); already MXU dtype
    k = k_ref[0]  # (tkv, C)
    v = v_ref[0]  # (tkv, C)
    for h in range(num_heads):
        lo = h * head_dim
        qh = q[:, lo:lo + head_dim]
        kh = k[:, lo:lo + head_dim]
        vh = v[:, lo:lo + head_dim]
        s = lax.dot_general(qh, kh, (((1,), (1,)), ((), ())),
                            preferred_element_type=jnp.float32)      # (tq, tkv)
        m_prev = m_ref[h]                                            # (tq, 1)
        m_new = jnp.maximum(m_prev, jnp.max(s, axis=-1, keepdims=True))
        alpha = jnp.exp(m_prev - m_new)
        p = jnp.exp(s - m_new)
        l_ref[h] = alpha * l_ref[h] + jnp.sum(p, axis=-1, keepdims=True)
        acc_ref[h] = alpha * acc_ref[h] + jnp.dot(
            p.astype(vh.dtype), vh, preferred_element_type=jnp.float32)
        m_ref[h] = m_new

    @pl.when(kv == pl.num_programs(2) - 1)
    def _():
        for h in range(num_heads):  # per-head direct stores (no concat epilogue)
            lo = h * head_dim
            inv = pl.reciprocal(l_ref[h], approx=True)   # EUP; weights internal
            o_ref[0, :, lo:lo + head_dim] = (acc_ref[h] * inv).astype(o_ref.dtype)


def _flash_attention(q, k, v, num_heads, head_dim, *, cols=(0, 0, 0),
                     tq=256, tkv=512):
    """q/k/v: (B, T, C) (or fused (B, T, 3C) with `cols`).  Returns out (B, Tq, C)."""
    B, Tq = q.shape[0], q.shape[1]
    Tk = k.shape[1]
    C = num_heads * head_dim
    qc, kc, vc = cols
    tq = _pick_tile(Tq, tq)
    tkv = _pick_tile(Tk, tkv)
    act_isz = q.dtype.itemsize
    block_bytes = (2 * (2 * tq * C + 2 * tkv * C) * act_isz
                   + num_heads * tq * (head_dim + 2) * 4)
    kern = functools.partial(_flash_attention_kernel, num_heads=num_heads,
                             head_dim=head_dim)
    return pl.pallas_call(
        kern,
        out_shape=jax.ShapeDtypeStruct((B, Tq, C), q.dtype),
        grid=(B, Tq // tq, Tk // tkv),
        in_specs=[
            pl.BlockSpec((1, tq, C), _qmap3(qc)),
            pl.BlockSpec((1, tkv, C), _kvmap3(kc)),
            pl.BlockSpec((1, tkv, C), _kvmap3(vc)),
        ],
        out_specs=pl.BlockSpec((1, tq, C), _qmap3(0)),
        scratch_shapes=[
            pltpu.VMEM((num_heads, tq, 1), jnp.float32),          # running max m
            pltpu.VMEM((num_heads, tq, 1), jnp.float32),          # running sum l
            pltpu.VMEM((num_heads, tq, head_dim), jnp.float32),   # output acc
        ],
        compiler_params=_mosaic_params(("parallel", "parallel", "arbitrary"),
                                       block_bytes),
    )(q, k, v)


# --------------------------- module wrapper ----------------------------------

class MultiHeadAttentionPallas:
    def __init__(self, num_heads, n_embed, key, *, use_bf16=False,
                 weights_dtype=None):
        assert n_embed % num_heads == 0
        self.num_heads = num_heads
        self.n_embed = n_embed
        self.head_dim = n_embed // num_heads  # d_k

        # Deterministic PyTorch-style init: U(-1/sqrt(fan_in), 1/sqrt(fan_in)).
        bound = 1.0 / math.sqrt(n_embed)
        kq, kk, kv, kp = jax.random.split(key, 4)
        shape = (n_embed, n_embed)  # PyTorch (out_features, in_features)
        w_query = jax.random.uniform(kq, shape, jnp.float32, -bound, bound)
        w_key = jax.random.uniform(kk, shape, jnp.float32, -bound, bound)
        w_value = jax.random.uniform(kv, shape, jnp.float32, -bound, bound)
        w_proj = jax.random.uniform(kp, shape, jnp.float32, -bound, bound)

        # Pre-transpose once (no per-call w.T) and fold 1/sqrt(d_k) into Wq.
        # (In bf16 mode the fold happens before the cast -- slightly different
        # rounding than scaling the f32 scores; negligible with f32 accumulate.)
        scale = 1.0 / math.sqrt(self.head_dim)
        param_dtype = jnp.bfloat16 if use_bf16 else jnp.float32
        self.w_query_t = (w_query * scale).T.astype(param_dtype)   # (C, C)
        self.w_key_t = w_key.T.astype(param_dtype)
        self.w_value_t = w_value.T.astype(param_dtype)
        self.w_proj_t = w_proj.T.astype(param_dtype)
        # Fused QKV weight (C, 3C) for the self-attention fast path.
        self.w_qkv_t = jnp.concatenate(
            [self.w_query_t, self.w_key_t, self.w_value_t], axis=1)
        # Activation dtype between stages: bf16 halves HBM traffic and VMEM
        # block sizes and removes all in-kernel casts; softmax math and matmul
        # accumulation stay f32 everywhere.
        self.act_dtype = jnp.bfloat16 if use_bf16 else jnp.float32
        self.wei_dtype = weights_dtype or self.act_dtype

    def __call__(self, query, key, value, mask=None, return_weights=True):
        assert mask is None  # TODO(synk): attention mask path not implemented
        B, T, C = query.shape
        H, D = self.num_heads, self.head_dim

        fused = (key is query) and (value is query)
        if fused:
            # Self-attention: one fused (B*T, C) x (C, 3C) tiled GEMM.
            qkv = _tiled_matmul(query.reshape(B * T, C), self.w_qkv_t,
                                out_dtype=self.act_dtype).reshape(B, T, 3 * C)
            if C % 128 == 0:
                # No XLA slices: the attention BlockSpecs pick the q/k/v column
                # blocks of the fused array directly via index_map.
                q_arr = k_arr = v_arr = qkv
                cols = (0, 1, 2)
            else:
                q_arr, k_arr, v_arr = (qkv[:, :, :C], qkv[:, :, C:2 * C],
                                       qkv[:, :, 2 * C:])
                cols = (0, 0, 0)
        else:
            q_arr = _tiled_matmul(query.reshape(B * T, C), self.w_query_t,
                                  out_dtype=self.act_dtype).reshape(B, T, C)
            k_arr = _tiled_matmul(key.reshape(-1, C), self.w_key_t,
                                  out_dtype=self.act_dtype).reshape(B, -1, C)
            v_arr = _tiled_matmul(value.reshape(-1, C), self.w_value_t,
                                  out_dtype=self.act_dtype).reshape(B, -1, C)
            cols = (0, 0, 0)

        if return_weights:
            attn_out, attn_wei = _attention_with_weights(
                q_arr, k_arr, v_arr, H, D, cols=cols, wei_dtype=self.wei_dtype)
        else:
            attn_out = _flash_attention(q_arr, k_arr, v_arr, H, D, cols=cols)
            attn_wei = None

        out = _tiled_matmul(attn_out.reshape(B * T, C), self.w_proj_t,
                            out_dtype=query.dtype).reshape(B, T, C)
        # TODO(synk): dropout is identity (eval mode / p == 0).
        if return_weights:
            return out, attn_wei
        return out


# ------------------------------ reference -------------------------------------

def _jax_reference(query, key, value, mha):
    """Pure-JAX reference (same weights; 1/sqrt(d_k) is folded into w_query_t)."""
    B, _, C = query.shape
    H, D = mha.num_heads, mha.head_dim
    q = query.astype(jnp.float32) @ mha.w_query_t.astype(jnp.float32)
    k = key.astype(jnp.float32) @ mha.w_key_t.astype(jnp.float32)
    v = value.astype(jnp.float32) @ mha.w_value_t.astype(jnp.float32)

    def split(x):
        return x.reshape(B, -1, H, D).transpose(0, 2, 1, 3)

    q, k, v = split(q), split(k), split(v)
    s = q @ jnp.swapaxes(k, -1, -2)
    w = jax.nn.softmax(s, axis=-1)
    o = (w @ v).transpose(0, 2, 1, 3).reshape(B, -1, C)
    return o @ mha.w_proj_t.astype(jnp.float32), w


# ------------------------------- main ----------------------------------------

if __name__ == "__main__":
    B, T, n_embed, num_heads = 2, 8, 32, 4

    root = jax.random.PRNGKey(0)
    k_params, k_q, k_k, k_v = jax.random.split(root, 4)

    mha = MultiHeadAttentionPallas(num_heads, n_embed, k_params)

    query = jax.random.normal(k_q, (B, T, n_embed), jnp.float32)
    key = jax.random.normal(k_k, (B, T, n_embed), jnp.float32)
    value = jax.random.normal(k_v, (B, T, n_embed), jnp.float32)

    # Cross-attention style (distinct q/k/v): three tiled projection GEMMs.
    out, attn_wei = mha(query, key, value)
    jax.block_until_ready((out, attn_wei))
    assert out.shape == (B, T, n_embed)
    assert attn_wei.shape == (B, num_heads, T, T)

    ref_out, ref_wei = _jax_reference(query, key, value, mha)
    assert jnp.allclose(out, ref_out, atol=2e-2, rtol=2e-2)
    assert jnp.allclose(attn_wei, ref_wei, atol=2e-2, rtol=2e-2)

    # Self-attention (shared activation): fused QKV projection path.
    out_sa, wei_sa = mha(query, query, query)
    jax.block_until_ready((out_sa, wei_sa))
    assert out_sa.shape == (B, T, n_embed)
    assert wei_sa.shape == (B, num_heads, T, T)

    # Flash / online-softmax fast path (attention weights not materialized).
    out_flash = mha(query, query, query, return_weights=False)
    jax.block_until_ready(out_flash)
    assert out_flash.shape == (B, T, n_embed)
    assert jnp.allclose(out_flash, out_sa, atol=2e-2, rtol=2e-2)

    print("KERNEL_OK")
</pallas_src>

<mosaic_0001>
module attributes {stable_mosaic.version = 11 : i64} {
  func.func @_matmul_kernel(%arg0: i32, %arg1: i32, %arg2: i32, %arg3: memref<16x32xf32, #tpu.memory_space<vmem>>, %arg4: memref<32x32xf32, #tpu.memory_space<vmem>>, %arg5: memref<16x32xf32, #tpu.memory_space<vmem>>, %arg6: memref<16x32xf32, #tpu.memory_space<vmem>>) attributes {dimension_semantics = [#tpu.dimension_semantics<parallel>, #tpu.dimension_semantics<parallel>, #tpu.dimension_semantics<arbitrary>], iteration_bounds = array<i64: 1, 1, 1>, scalar_prefetch = 0 : i64, scratch_operands = 1 : i64, tpu.core_type = #tpu.core_type<tc>, window_params = [{transform_indices = @transform_0, window_bounds = array<i64: 16, 32>}, {transform_indices = @transform_1, window_bounds = array<i64: 32, 32>}, {transform_indices = @transform_2, window_bounds = array<i64: 16, 32>}]} {
    %c0_i32 = arith.constant 0 : i32
    %0 = arith.cmpi eq, %arg2, %c0_i32 : i32
    %1 = arith.extui %0 : i1 to i32
    %c0_i32_0 = arith.constant 0 : i32
    %2 = arith.cmpi ne, %1, %c0_i32_0 : i32
    scf.if %2 {
      %cst_10 = arith.constant 0.000000e+00 : f32
      %12 = vector.broadcast %cst_10 : f32 to vector<16x32xf32>
      %c0_11 = arith.constant 0 : index
      %c0_12 = arith.constant 0 : index
      %13 = vector.load %arg6[%c0_11, %c0_12] : memref<16x32xf32, #tpu.memory_space<vmem>>, vector<16x32xf32>
      tpu.vector_store %arg6[%c0_11, %c0_12], %12 {strides = array<i32>} : memref<16x32xf32, #tpu.memory_space<vmem>>, vector<16x32xf32>,
    } else {
    }
    %c0 = arith.constant 0 : index
    %c0_1 = arith.constant 0 : index
    %3 = vector.load %arg3[%c0, %c0_1] : memref<16x32xf32, #tpu.memory_space<vmem>>, vector<16x32xf32>
    %c0_2 = arith.constant 0 : index
    %c0_3 = arith.constant 0 : index
    %4 = vector.load %arg4[%c0_2, %c0_3] : memref<32x32xf32, #tpu.memory_space<vmem>>, vector<32x32xf32>
    %c0_4 = arith.constant 0 : index
    %c0_5 = arith.constant 0 : index
    %5 = vector.load %arg6[%c0_4, %c0_5] : memref<16x32xf32, #tpu.memory_space<vmem>>, vector<16x32xf32>
    %cst = arith.constant dense<0.000000e+00> : vector<16x32xf32>
    %6 = tpu.matmul %3, %4, %cst {dimension_numbers = #tpu.dot_dimension_numbers<[1], [0], [0], [1], [0, 0, 1, 1], [], []>} : vector<16x32xf32>, vector<32x32xf32>, vector<16x32xf32> -> vector<16x32xf32>
    %7 = arith.addf %5, %6 : vector<16x32xf32>
    %c0_6 = arith.constant 0 : index
    %c0_7 = arith.constant 0 : index
    %8 = vector.load %arg6[%c0_6, %c0_7] : memref<16x32xf32, #tpu.memory_space<vmem>>, vector<16x32xf32>
    tpu.vector_store %arg6[%c0_6, %c0_7], %7 {strides = array<i32>} : memref<16x32xf32, #tpu.memory_space<vmem>>, vector<16x32xf32>,
    %c0_i32_8 = arith.constant 0 : i32
    %9 = arith.cmpi eq, %arg2, %c0_i32_8 : i32
    %10 = arith.extui %9 : i1 to i32
    %c0_i32_9 = arith.constant 0 : i32
    %11 = arith.cmpi ne, %10, %c0_i32_9 : i32
    scf.if %11 {
      %c0_10 = arith.constant 0 : index
      %c0_11 = arith.constant 0 : index
      %12 = vector.load %arg6[%c0_10, %c0_11] : memref<16x32xf32, #tpu.memory_space<vmem>>, vector<16x32xf32>
      %c0_12 = arith.constant 0 : index
      %c0_13 = arith.constant 0 : index
      %13 = vector.load %arg5[%c0_12, %c0_13] : memref<16x32xf32, #tpu.memory_space<vmem>>, vector<16x32xf32>
      tpu.vector_store %arg5[%c0_12, %c0_13], %12 {strides = array<i32>} : memref<16x32xf32, #tpu.memory_space<vmem>>, vector<16x32xf32>,
    } else {
    }
    return
  }
  func.func @transform_0(%arg0: i32, %arg1: i32, %arg2: i32) -> (i32, i32) {
    %c0_i32 = arith.constant 0 : i32
    return %arg0, %arg2 : i32, i32
  }
  func.func @transform_1(%arg0: i32, %arg1: i32, %arg2: i32) -> (i32, i32) {
    %c0_i32 = arith.constant 0 : i32
    return %arg2, %arg1 : i32, i32
  }
  func.func @transform_2(%arg0: i32, %arg1: i32, %arg2: i32) -> (i32, i32) {
    %c0_i32 = arith.constant 0 : i32
    return %arg0, %arg1 : i32, i32
  }
}

</mosaic_0001>

<llo_original>
// kernel: tpu_custom_call.1
$region0: #{tpu_custom_call.1}
  #allocation0 [shape = 'u32[]', space=smem, size = 0x4, offset = 0x4, fixed_abs, tag = 'smem constant byte address 0x4 - core index']
  #allocation1 [shape = 'u32[144,128]{1,0:T(1,128)}', space=vmem, size = 0x12000, scoped, tag = 'internal scratch']
  #allocation2 [shape = 'f32[16,32]{1,0:T(8,128)}', space=vmem, size = 0x2000, scoped, tag = 'scratch operand']
  %s0 = inlined_call_operand.hbm [shape: f32[16,32], index: 0, kind: input, shape index: {}]
  %s1 = inlined_call_operand.hbm [shape: f32[32,32], index: 1, kind: input, shape index: {}]
  %s2 = inlined_call_operand.hbm [shape: f32[16,32], index: 2, kind: output, shape index: {}]
  %s3 = sld [smem:[#allocation0]]
  $region34: #{tpu_custom_call.1} parent=0
    _
  %s5 = ssub.s32 1, %s3
  %s6 = scalar_select 0, %s5, %s3
  $region1: #{tpu_custom_call.1} parent=0
    #allocation3 [shape = 'u8[8192]{0}', space=vmem, size = 0x2000, scoped, tag = 'input window, operand 0, single buffered']
    #allocation4 [shape = 's32[1]{0}', space=sflag, size = 0x4, scoped, tag = 'scoped memory for tpu_custom_call.1']
    #allocation5 [shape = 's32[1]{0}', space=sflag, size = 0x4, scoped, tag = 'scoped memory for tpu_custom_call.1']
    #allocation6 [shape = 'u8[16384]{0}', space=vmem, size = 0x4000, scoped, tag = 'input window, operand 1, single buffered']
    #allocation7 [shape = 's32[1]{0}', space=sflag, size = 0x4, scoped, tag = 'scoped memory for tpu_custom_call.1']
    #allocation8 [shape = 'u8[8192]{0}', space=vmem, size = 0x2000, scoped, tag = 'output window, operand 0, single buffered']
    %7 = vsyncpa [#allocation4], 0
    %8 = vsyncpa [#allocation7], 0
    %9 = vsyncpa [#allocation5], 0
    // Predicated region
    $region2: #{tpu_custom_call.1} parent=1 // pred_check
      _
    $region3: #{tpu_custom_call.1} parent=1 // pred_check_branch
      %11 = sbr.rel (0) target = $region5
    $region4: #{tpu_custom_call.1} parent=1 // pred_region
      %s13 = ssub.s32 256, 256
      %14 = vsyncadd [#allocation4], %s13
      %s15 = sshll.u32 [#allocation3], 4
      %s16 = int_to_ptr.vmem [resolvable:$true] %s15
      %21 = dma.hbm_to_vmem [thread:$0]  %s0, 256, %s16, [#allocation4], 128, 128, 8
    $region5: #{tpu_custom_call.1} parent=1 // pred_fallthru
      _
    // Predicated region
    $region6: #{tpu_custom_call.1} parent=1 // pred_check
      _
    $region7: #{tpu_custom_call.1} parent=1 // pred_check_branch
      %23 = sbr.rel (0) target = $region9
    $region8: #{tpu_custom_call.1} parent=1 // pred_region
      %s25 = ssub.s32 512, 512
      %26 = vsyncadd [#allocation7], %s25
      %s27 = sshll.u32 [#allocation6], 4
      %s28 = int_to_ptr.vmem [resolvable:$true] %s27
      %33 = dma.hbm_to_vmem [thread:$0]  %s1, 512, %s28, [#allocation7], 128, 128, 8
    $region9: #{tpu_custom_call.1} parent=1 // pred_fallthru
      _
    // Predicated region
    $region10: #{tpu_custom_call.1} parent=1 // pred_check
      _
    $region11: #{tpu_custom_call.1} parent=1 // pred_check_branch
      %35 = sbr.rel (0) target = $region13
    $region12: #{tpu_custom_call.1} parent=1 // pred_region
      %36 = dma.done [#allocation4], 256
    $region13: #{tpu_custom_call.1} parent=1 // pred_fallthru
      _
    // Predicated region
    $region14: #{tpu_custom_call.1} parent=1 // pred_check
      _
    $region15: #{tpu_custom_call.1} parent=1 // pred_check_branch
      %38 = sbr.rel (0) target = $region17
    $region16: #{tpu_custom_call.1} parent=1 // pred_region
      %39 = dma.done [#allocation7], 512
    $region17: #{tpu_custom_call.1} parent=1 // pred_fallthru
      _
    %p40 = scmp.eq.s32.totalorder 0, 0
    // Predicated region
    $region18: #{tpu_custom_call.1} parent=1 // pred_check
      %p41 = pneg %p40
    $region19: #{tpu_custom_call.1} parent=1 // pred_check_branch
      %43 = sbr.rel (%p41) target = $region21
    $region20: #{tpu_custom_call.1} parent=1 // pred_region
      %vm44 = vcmask 261120
      %45 = vst.msk [vmem:[#allocation2] sm:$0xff] %vm44, 0.0
      %46 = vst.msk [vmem:[#allocation2 + $0x8] sm:$0xff] %vm44, 0.0
    $region21: #{tpu_custom_call.1} parent=1 // pred_fallthru
      _
    %v47 = vld [vmem:[#allocation3] sm:$0xff]
    %v48 = vld [vmem:[#allocation3 + $0x8] sm:$0xff]
    %v49 = vld [vmem:[#allocation6] sm:$0xff]
    %v50 = vld [vmem:[#allocation6 + $0x8] sm:$0xff]
    %v51 = vld [vmem:[#allocation6 + $0x10] sm:$0xff]
    %v52 = vld [vmem:[#allocation6 + $0x18] sm:$0xff]
    %v53 = vld [vmem:[#allocation2] sm:$0xff]
    %v54 = vld [vmem:[#allocation2 + $0x8] sm:$0xff]
    %vm55 = vcmask 261120
    %v57 = vsel %vm55, %v47, 0
    %v60 = vsel %vm55, %v48, 0
    %62 = vmatprep.subr.mxu0 0.0
    %63 = vmatpush1.msra.mxu0 0.0
    %64 = vmatprep.subr.mxu0 0.0
    %65 = vmatpush1.msra.mxu0 0.0
    %66 = vmatprep.subr.mxu0 0.0
    %67 = vmatpush1.msra.mxu0 0.0
    %68 = vmatprep.subr.mxu0 0.0
    %69 = vmatpush1.msra.mxu0 0.0
    %70 = vmatprep.subr.mxu0 0.0
    %71 = vmatpush1.msra.mxu0 0.0
    %72 = vmatprep.subr.mxu0 0.0
    %73 = vmatpush1.msra.mxu0 0.0
    %74 = vmatprep.subr.mxu0 0.0
    %75 = vmatpush1.msra.mxu0 0.0
    %76 = vmatprep.subr.mxu0 0.0
    %77 = vmatpush1.msra.mxu0 0.0
    %78 = vmatprep.subr.mxu0 0.0
    %79 = vmatpush1.msra.mxu0 0.0
    %80 = vmatprep.subr.mxu0 0.0
    %81 = vmatpush1.msra.mxu0 0.0
    %82 = vmatprep.subr.mxu0 0.0
    %83 = vmatpush1.msra.mxu0 0.0
    %84 = vmatprep.subr.mxu0 0.0
    %85 = vmatpush1.msra.mxu0 0.0
    %86 = vmatprep.subr.mxu0 0.0
    %87 = vmatpush1.msra.mxu0 %v52
    %88 = vmatprep.subr.mxu0 0.0
    %89 = vmatpush1.msra.mxu0 %v51
    %90 = vmatprep.subr.mxu0 0.0
    %91 = vmatpush1.msra.mxu0 %v50
    %92 = vmatprep.subr.mxu0 0.0
    %93 = vmatpush1.msra.mxu0 %v49
    %94 = vmatprep.subr.mxu0 0.0
    %95 = vmatpush2.msra.mxu0 0.0
    %96 = vmatprep.subr.mxu0 0.0
    %97 = vmatpush2.msra.mxu0 0.0
    %98 = vmatprep.subr.mxu0 0.0
    %99 = vmatpush2.msra.mxu0 0.0
    %100 = vmatprep.subr.mxu0 0.0
    %101 = vmatpush2.msra.mxu0 0.0
    %102 = vmatprep.subr.mxu0 0.0
    %103 = vmatpush2.msra.mxu0 0.0
    %104 = vmatprep.subr.mxu0 0.0
    %105 = vmatpush2.msra.mxu0 0.0
    %106 = vmatprep.subr.mxu0 0.0
    %107 = vmatpush2.msra.mxu0 0.0
    %108 = vmatprep.subr.mxu0 0.0
    %109 = vmatpush2.msra.mxu0 0.0
    %110 = vmatprep.subr.mxu0 0.0
    %111 = vmatpush2.msra.mxu0 0.0
    %112 = vmatprep.subr.mxu0 0.0
    %113 = vmatpush2.msra.mxu0 0.0
    %114 = vmatprep.subr.mxu0 0.0
    %115 = vmatpush2.msra.mxu0 0.0
    %116 = vmatprep.subr.mxu0 0.0
    %117 = vmatpush2.msra.mxu0 0.0
    %118 = vmatprep.subr.mxu0 0.0
    %119 = vmatpush2.msra.mxu0 0.0
    %120 = vmatprep.subr.mxu0 0.0
    %121 = vmatpush2.msra.mxu0 0.0
    %122 = vmatprep.subr.mxu0 0.0
    %123 = vmatpush2.msra.mxu0 0.0
    %124 = vmatprep.subr.mxu0 0.0
    %125 = vmatpush2.msra.mxu0 0.0
    %126 = vmatprep.mubr.f32.mxu0 0.0
    %127 = vmatmul.mubr.f32.gmra.mxu0 %v57
    %v128 = vpop.f32.mrf.mxu0
    %v129 = vadd.f32 0.0, %v128
    %v130 = vpop.f32.mrf.mxu0
    %131 = vmatprep.mubr.f32.mxu0 0.0
    %132 = vmatmul.mubr.f32.gmra.mxu0 %v60
    %v133 = vpop.f32.mrf.mxu0
    %v134 = vadd.f32 0.0, %v133
    %v135 = vpop.f32.mrf.mxu0
    %136 = vdwg.mxu0
    %v137 = vadd.f32 %v53, %v129
    %v138 = vadd.f32 %v54, %v134
    %139 = vst.msk [vmem:[#allocation2] sm:$0xff] %vm55, %v137
    %140 = vst.msk [vmem:[#allocation2 + $0x8] sm:$0xff] %vm55, %v138
    // Predicated region
    $region22: #{tpu_custom_call.1} parent=1 // pred_check
      %p141 = pneg %p40
    $region23: #{tpu_custom_call.1} parent=1 // pred_check_branch
      %143 = sbr.rel (%p141) target = $region25
    $region24: #{tpu_custom_call.1} parent=1 // pred_region
      %v144 = vld [vmem:[#allocation2] sm:$0xff]
      %v145 = vld [vmem:[#allocation2 + $0x8] sm:$0xff]
      %146 = vst.msk [vmem:[#allocation8] sm:$0xff] %vm55, %v144
      %147 = vst.msk [vmem:[#allocation8 + $0x8] sm:$0xff] %vm55, %v145
    $region25: #{tpu_custom_call.1} parent=1 // pred_fallthru
      _
    // Predicated region
    $region26: #{tpu_custom_call.1} parent=1 // pred_check
      _
    $region27: #{tpu_custom_call.1} parent=1 // pred_check_branch
      %149 = sbr.rel (0) target = $region29
    $region28: #{tpu_custom_call.1} parent=1 // pred_region
      %s151 = ssub.s32 256, 256
      %152 = vsyncadd [#allocation5], %s151
      %s153 = sshll.u32 [#allocation8], 4
      %s154 = int_to_ptr.vmem [resolvable:$true] %s153
      %159 = dma.vmem_to_hbm [thread:$0]  %s154, 256, %s2, [#allocation5], 128, 128, 8
    $region29: #{tpu_custom_call.1} parent=1 // pred_fallthru
      _
    // Predicated region
    $region30: #{tpu_custom_call.1} parent=1 // pred_check
      _
    $region31: #{tpu_custom_call.1} parent=1 // pred_check_branch
      %161 = sbr.rel (0) target = $region33
    $region32: #{tpu_custom_call.1} parent=1 // pred_region
      %162 = dma.done [#allocation5], 256
    $region33: #{tpu_custom_call.1} parent=1 // pred_fallthru
      _
    %163 = vsyncpa [#allocation4], 1
    %164 = vsyncpa [#allocation7], 1
    %165 = vsyncpa [#allocation5], 1

</llo_original>
